<compile_context>
chip_gen: v7x
topology: tpu7x:2x2x1
jax: 0.10.0
libtpu: 0.0.40
codegen_flags: <defaults>
</compile_context>

<pallas_src>
import functools

import jax
import jax.numpy as jnp
from jax.experimental import pallas as pl
from jax.experimental.pallas import tpu as pltpu


# ----------------------------------------------------------------------------
# Kernel
# ----------------------------------------------------------------------------
def _fused_imu_encoder_kernel(*refs, layer_cfg, block_b):
    """Fused Conv1d(+ReLU) stack for a block of `block_b` samples.

    refs = (x_ref, w0_ref, b0_ref, w1_ref, b1_ref, ..., o_ref)
      x_ref : (block_b, L, C0)     NLC tile (channels on the lane axis)
      wi_ref: (Ki*Ci, Ci+1)        im2col-packed conv weight
      bi_ref: (1, Ci+1)            bias row
      o_ref : (block_b, L_out, C_last)
    layer_cfg: tuple of (kernel_size, apply_relu) per layer (static).
    """
    x_ref = refs[0]
    o_ref = refs[-1]
    param_refs = refs[1:-1]

    n_layers = len(layer_cfg)
    # Hoist the (tiny, grid-resident) parameter loads out of the sample loop.
    ws = [param_refs[2 * i][...].astype(jnp.float32) for i in range(n_layers)]
    bs = [param_refs[2 * i + 1][...].astype(jnp.float32)
          for i in range(n_layers)]

    l_in0 = x_ref.shape[1]

    for b in range(block_b):                     # static unroll, block_b small
        h = None
        for i, (ksize, apply_relu) in enumerate(layer_cfg):
            if i == 0:
                l_out = l_in0 - ksize + 1
                # Slice the ref directly: one tap-shifted view per k.
                taps = [x_ref[b, k:k + l_out, :].astype(jnp.float32)
                        for k in range(ksize)]
            else:
                l_out = h.shape[0] - ksize + 1
                taps = [h[k:k + l_out, :] for k in range(ksize)]

            # im2col along the lane axis -> single 2-D MXU matmul per layer.
            xcol = taps[0] if ksize == 1 else jnp.concatenate(taps, axis=-1)
            y = jnp.dot(xcol, ws[i], preferred_element_type=jnp.float32)
            y = y + bs[i]                        # (1, C_out) broadcasts
            if apply_relu:
                y = jnp.maximum(y, 0.0)
            h = y

        o_ref[b] = h.astype(o_ref.dtype)


# ----------------------------------------------------------------------------
# Host-side packing + wrapper
# ----------------------------------------------------------------------------
def _pack_params(params):
    """PyTorch Conv1d params (w:(C_out,C_in,K), b:(C_out,)) -> im2col layout.

    w_col[k*C_in + ci, co] = w[co, ci, k]   (so xcol @ w_col == valid conv1d)
    """
    layer_cfg = []
    flat = []
    n_layers = len(params)
    for i, (w, b) in enumerate(params):
        c_out, c_in, k = w.shape
        w_col = jnp.transpose(w, (2, 1, 0)).reshape(k * c_in, c_out)
        flat += [w_col, b.reshape(1, c_out)]
        layer_cfg.append((int(k), i < n_layers - 1))   # last ReLU is popped
    return tuple(layer_cfg), flat


def imu_encoder_forward(x_ncl, params, *, max_block_b=8):
    """x_ncl: (N, C0, L) as in PyTorch.  Returns (N, C_last, L_out)."""
    n, c0, l = x_ncl.shape
    layer_cfg, flat_params = _pack_params(params)

    l_out, c_out = l, c0
    for (w, _), (ksize, _) in zip(params, layer_cfg):
        l_out = l_out - ksize + 1
        c_out = w.shape[0]

    x_nlc = jnp.transpose(x_ncl, (0, 2, 1))   # channels -> lane axis

    bb = min(n, max_block_b)
    n_blocks = pl.cdiv(n, bb)
    n_pad = n_blocks * bb
    if n_pad != n:
        # Pad batch to a whole number of blocks; padded rows are discarded.
        x_nlc = jnp.pad(x_nlc, ((0, n_pad - n), (0, 0), (0, 0)))

    kernel = functools.partial(_fused_imu_encoder_kernel,
                               layer_cfg=layer_cfg, block_b=bb)

    in_specs = [pl.BlockSpec((bb, l, c0), lambda i: (i, 0, 0))]
    for p in flat_params:
        # Whole (tiny) weight/bias resident every grid step; constant block
        # index -> fetched once.
        in_specs.append(
            pl.BlockSpec(p.shape, lambda i, nd=p.ndim: (0,) * nd))
    out_spec = pl.BlockSpec((bb, l_out, c_out), lambda i: (i, 0, 0))

    out_nlc = pl.pallas_call(
        kernel,
        grid=(n_blocks,),
        in_specs=in_specs,
        out_specs=out_spec,
        out_shape=jax.ShapeDtypeStruct((n_pad, l_out, c_out), x_ncl.dtype),
        compiler_params=pltpu.CompilerParams(
            dimension_semantics=("parallel",)),   # shards blocks over TCs (v7x)
    )(x_nlc, *flat_params)

    if n_pad != n:
        out_nlc = out_nlc[:n]
    return jnp.transpose(out_nlc, (0, 2, 1))      # NLC -> NCL (PyTorch layout)


# ----------------------------------------------------------------------------
# Params + pure-JAX reference (PyTorch Conv1d semantics)
# ----------------------------------------------------------------------------
def init_params(key, kernels, channels):
    """Deterministic Conv1d params in PyTorch layout: w (C_out, C_in, K), b (C_out,)."""
    params = []
    for i, k in enumerate(kernels):
        key, kw, kb = jax.random.split(key, 3)
        c_in, c_out = channels[i], channels[i + 1]
        bound = 1.0 / jnp.sqrt(c_in * k)
        w = jax.random.uniform(kw, (c_out, c_in, k), jnp.float32, -bound, bound)
        b = jax.random.uniform(kb, (c_out,), jnp.float32, -bound, bound)
        params.append((w, b))
    return params


def imu_encoder_reference(x_ncl, params):
    h = x_ncl
    n_layers = len(params)
    for i, (w, b) in enumerate(params):
        h = jax.lax.conv_general_dilated(
            h, w, window_strides=(1,), padding="VALID",
            dimension_numbers=("NCH", "OIH", "NCH"))
        h = h + b[None, :, None]
        if i < n_layers - 1:
            h = jnp.maximum(h, 0.0)
    return h


# ----------------------------------------------------------------------------
if __name__ == "__main__":
    # IMU_Encoder(window=16, kernels=[3, 3], channels=[4, 8, 16])
    window = 16
    kernels = [3, 3]
    channels = [4, 8, 16]
    batch = 2

    key = jax.random.PRNGKey(0)
    key, kx = jax.random.split(key)
    x = jax.random.normal(kx, (batch, channels[0], window), jnp.float32)
    params = init_params(key, kernels, channels)

    out = jax.block_until_ready(imu_encoder_forward(x, params))
    ref = imu_encoder_reference(x, params)

    expected_len = window - sum(k - 1 for k in kernels)
    assert out.shape == (batch, channels[-1], expected_len), out.shape
    assert jnp.allclose(out, ref, atol=1e-4, rtol=1e-4), \
        float(jnp.max(jnp.abs(out - ref)))

    print("KERNEL_OK")
</pallas_src>

<mosaic_0001>
module attributes {stable_mosaic.version = 11 : i64} {
  func.func @_fused_imu_encoder_kernel(%arg0: i32, %arg1: memref<2x16x4xf32, #tpu.memory_space<vmem>>, %arg2: memref<12x8xf32, #tpu.memory_space<vmem>>, %arg3: memref<1x8xf32, #tpu.memory_space<vmem>>, %arg4: memref<24x16xf32, #tpu.memory_space<vmem>>, %arg5: memref<1x16xf32, #tpu.memory_space<vmem>>, %arg6: memref<2x12x16xf32, #tpu.memory_space<vmem>>) attributes {dimension_semantics = [#tpu.dimension_semantics<parallel>], iteration_bounds = array<i64: 1>, scalar_prefetch = 0 : i64, scratch_operands = 0 : i64, tpu.core_type = #tpu.core_type<tc>, window_params = [{transform_indices = @transform_0, window_bounds = array<i64: 2, 16, 4>}, {pipeline_mode = #tpu.pipeline_mode<synchronous>, transform_indices = @transform_1, window_bounds = array<i64: 12, 8>}, {pipeline_mode = #tpu.pipeline_mode<synchronous>, transform_indices = @transform_2, window_bounds = array<i64: 1, 8>}, {pipeline_mode = #tpu.pipeline_mode<synchronous>, transform_indices = @transform_3, window_bounds = array<i64: 24, 16>}, {pipeline_mode = #tpu.pipeline_mode<synchronous>, transform_indices = @transform_4, window_bounds = array<i64: 1, 16>}, {transform_indices = @transform_5, window_bounds = array<i64: 2, 12, 16>}]} {
    %c0 = arith.constant 0 : index
    %c0_0 = arith.constant 0 : index
    %0 = vector.load %arg2[%c0, %c0_0] : memref<12x8xf32, #tpu.memory_space<vmem>>, vector<12x8xf32>
    %c0_1 = arith.constant 0 : index
    %c0_2 = arith.constant 0 : index
    %1 = vector.load %arg4[%c0_1, %c0_2] : memref<24x16xf32, #tpu.memory_space<vmem>>, vector<24x16xf32>
    %c0_3 = arith.constant 0 : index
    %c0_4 = arith.constant 0 : index
    %2 = vector.load %arg3[%c0_3, %c0_4] : memref<1x8xf32, #tpu.memory_space<vmem>>, vector<1x8xf32>
    %c0_5 = arith.constant 0 : index
    %c0_6 = arith.constant 0 : index
    %3 = vector.load %arg5[%c0_5, %c0_6] : memref<1x16xf32, #tpu.memory_space<vmem>>, vector<1x16xf32>
    %c0_7 = arith.constant 0 : index
    %c0_8 = arith.constant 0 : index
    %c0_9 = arith.constant 0 : index
    %4 = vector.load %arg1[%c0_7, %c0_8, %c0_9] : memref<2x16x4xf32, #tpu.memory_space<vmem>>, vector<1x14x4xf32>
    %5 = vector.shape_cast %4 : vector<1x14x4xf32> to vector<14x4xf32>
    %c0_10 = arith.constant 0 : index
    %c1 = arith.constant 1 : index
    %c0_11 = arith.constant 0 : index
    %6 = vector.load %arg1[%c0_10, %c1, %c0_11] : memref<2x16x4xf32, #tpu.memory_space<vmem>>, vector<1x14x4xf32>
    %7 = vector.shape_cast %6 : vector<1x14x4xf32> to vector<14x4xf32>
    %c0_12 = arith.constant 0 : index
    %c2 = arith.constant 2 : index
    %c0_13 = arith.constant 0 : index
    %8 = vector.load %arg1[%c0_12, %c2, %c0_13] : memref<2x16x4xf32, #tpu.memory_space<vmem>>, vector<1x14x4xf32>
    %9 = vector.shape_cast %8 : vector<1x14x4xf32> to vector<14x4xf32>
    %10 = tpu.concatenate %5, %7, %9 in 1 : vector<14x4xf32>, vector<14x4xf32>, vector<14x4xf32> -> vector<14x12xf32>
    %cst = arith.constant dense<0.000000e+00> : vector<14x8xf32>
    %11 = tpu.matmul %10, %0, %cst {dimension_numbers = #tpu.dot_dimension_numbers<[1], [0], [0], [1], [0, 0, 1, 1], [], []>} : vector<14x12xf32>, vector<12x8xf32>, vector<14x8xf32> -> vector<14x8xf32>
    %12 = vector.broadcast %2 : vector<1x8xf32> to vector<14x8xf32>
    %13 = arith.addf %11, %12 : vector<14x8xf32>
    %cst_14 = arith.constant 0.000000e+00 : f32
    %14 = vector.broadcast %cst_14 : f32 to vector<14x8xf32>
    %15 = arith.maximumf %13, %14 : vector<14x8xf32>
    %16 = vector.extract_strided_slice %15 {offsets = [0, 0], sizes = [12, 8], strides = [1, 1]} : vector<14x8xf32> to vector<12x8xf32>
    %17 = vector.extract_strided_slice %15 {offsets = [1, 0], sizes = [12, 8], strides = [1, 1]} : vector<14x8xf32> to vector<12x8xf32>
    %18 = vector.extract_strided_slice %15 {offsets = [2, 0], sizes = [12, 8], strides = [1, 1]} : vector<14x8xf32> to vector<12x8xf32>
    %19 = tpu.concatenate %16, %17, %18 in 1 : vector<12x8xf32>, vector<12x8xf32>, vector<12x8xf32> -> vector<12x24xf32>
    %cst_15 = arith.constant dense<0.000000e+00> : vector<12x16xf32>
    %20 = tpu.matmul %19, %1, %cst_15 {dimension_numbers = #tpu.dot_dimension_numbers<[1], [0], [0], [1], [0, 0, 1, 1], [], []>} : vector<12x24xf32>, vector<24x16xf32>, vector<12x16xf32> -> vector<12x16xf32>
    %21 = vector.broadcast %3 : vector<1x16xf32> to vector<12x16xf32>
    %22 = arith.addf %20, %21 : vector<12x16xf32>
    %c0_16 = arith.constant 0 : index
    %c0_17 = arith.constant 0 : index
    %c0_18 = arith.constant 0 : index
    %23 = vector.load %arg6[%c0_16, %c0_17, %c0_18] : memref<2x12x16xf32, #tpu.memory_space<vmem>>, vector<1x12x16xf32>
    %24 = vector.shape_cast %23 : vector<1x12x16xf32> to vector<12x16xf32>
    %25 = vector.shape_cast %22 : vector<12x16xf32> to vector<1x12x16xf32>
    tpu.vector_store %arg6[%c0_16, %c0_17, %c0_18], %25 {strides = array<i32>} : memref<2x12x16xf32, #tpu.memory_space<vmem>>, vector<1x12x16xf32>,
    %c1_19 = arith.constant 1 : index
    %c0_20 = arith.constant 0 : index
    %c0_21 = arith.constant 0 : index
    %26 = vector.load %arg1[%c1_19, %c0_20, %c0_21] : memref<2x16x4xf32, #tpu.memory_space<vmem>>, vector<1x14x4xf32>
    %27 = vector.shape_cast %26 : vector<1x14x4xf32> to vector<14x4xf32>
    %c1_22 = arith.constant 1 : index
    %c1_23 = arith.constant 1 : index
    %c0_24 = arith.constant 0 : index
    %28 = vector.load %arg1[%c1_22, %c1_23, %c0_24] : memref<2x16x4xf32, #tpu.memory_space<vmem>>, vector<1x14x4xf32>
    %29 = vector.shape_cast %28 : vector<1x14x4xf32> to vector<14x4xf32>
    %c1_25 = arith.constant 1 : index
    %c2_26 = arith.constant 2 : index
    %c0_27 = arith.constant 0 : index
    %30 = vector.load %arg1[%c1_25, %c2_26, %c0_27] : memref<2x16x4xf32, #tpu.memory_space<vmem>>, vector<1x14x4xf32>
    %31 = vector.shape_cast %30 : vector<1x14x4xf32> to vector<14x4xf32>
    %32 = tpu.concatenate %27, %29, %31 in 1 : vector<14x4xf32>, vector<14x4xf32>, vector<14x4xf32> -> vector<14x12xf32>
    %cst_28 = arith.constant dense<0.000000e+00> : vector<14x8xf32>
    %33 = tpu.matmul %32, %0, %cst_28 {dimension_numbers = #tpu.dot_dimension_numbers<[1], [0], [0], [1], [0, 0, 1, 1], [], []>} : vector<14x12xf32>, vector<12x8xf32>, vector<14x8xf32> -> vector<14x8xf32>
    %34 = vector.broadcast %2 : vector<1x8xf32> to vector<14x8xf32>
    %35 = arith.addf %33, %34 : vector<14x8xf32>
    %cst_29 = arith.constant 0.000000e+00 : f32
    %36 = vector.broadcast %cst_29 : f32 to vector<14x8xf32>
    %37 = arith.maximumf %35, %36 : vector<14x8xf32>
    %38 = vector.extract_strided_slice %37 {offsets = [0, 0], sizes = [12, 8], strides = [1, 1]} : vector<14x8xf32> to vector<12x8xf32>
    %39 = vector.extract_strided_slice %37 {offsets = [1, 0], sizes = [12, 8], strides = [1, 1]} : vector<14x8xf32> to vector<12x8xf32>
    %40 = vector.extract_strided_slice %37 {offsets = [2, 0], sizes = [12, 8], strides = [1, 1]} : vector<14x8xf32> to vector<12x8xf32>
    %41 = tpu.concatenate %38, %39, %40 in 1 : vector<12x8xf32>, vector<12x8xf32>, vector<12x8xf32> -> vector<12x24xf32>
    %cst_30 = arith.constant dense<0.000000e+00> : vector<12x16xf32>
    %42 = tpu.matmul %41, %1, %cst_30 {dimension_numbers = #tpu.dot_dimension_numbers<[1], [0], [0], [1], [0, 0, 1, 1], [], []>} : vector<12x24xf32>, vector<24x16xf32>, vector<12x16xf32> -> vector<12x16xf32>
    %43 = vector.broadcast %3 : vector<1x16xf32> to vector<12x16xf32>
    %44 = arith.addf %42, %43 : vector<12x16xf32>
    %c1_31 = arith.constant 1 : index
    %c0_32 = arith.constant 0 : index
    %c0_33 = arith.constant 0 : index
    %45 = vector.load %arg6[%c1_31, %c0_32, %c0_33] : memref<2x12x16xf32, #tpu.memory_space<vmem>>, vector<1x12x16xf32>
    %46 = vector.shape_cast %45 : vector<1x12x16xf32> to vector<12x16xf32>
    %47 = vector.shape_cast %44 : vector<12x16xf32> to vector<1x12x16xf32>
    tpu.vector_store %arg6[%c1_31, %c0_32, %c0_33], %47 {strides = array<i32>} : memref<2x12x16xf32, #tpu.memory_space<vmem>>, vector<1x12x16xf32>,
    return
  }
  func.func @transform_0(%arg0: i32) -> (i32, i32, i32) {
    %c0_i32 = arith.constant 0 : i32
    %c0_i32_0 = arith.constant 0 : i32
    %c0_i32_1 = arith.constant 0 : i32
    return %arg0, %c0_i32, %c0_i32_0 : i32, i32, i32
  }
  func.func @transform_1(%arg0: i32) -> (i32, i32) {
    %c0_i32 = arith.constant 0 : i32
    %c0_i32_0 = arith.constant 0 : i32
    %c0_i32_1 = arith.constant 0 : i32
    return %c0_i32, %c0_i32_0 : i32, i32
  }
  func.func @transform_2(%arg0: i32) -> (i32, i32) {
    %c0_i32 = arith.constant 0 : i32
    %c0_i32_0 = arith.constant 0 : i32
    %c0_i32_1 = arith.constant 0 : i32
    return %c0_i32, %c0_i32_0 : i32, i32
  }
  func.func @transform_3(%arg0: i32) -> (i32, i32) {
    %c0_i32 = arith.constant 0 : i32
    %c0_i32_0 = arith.constant 0 : i32
    %c0_i32_1 = arith.constant 0 : i32
    return %c0_i32, %c0_i32_0 : i32, i32
  }
  func.func @transform_4(%arg0: i32) -> (i32, i32) {
    %c0_i32 = arith.constant 0 : i32
    %c0_i32_0 = arith.constant 0 : i32
    %c0_i32_1 = arith.constant 0 : i32
    return %c0_i32, %c0_i32_0 : i32, i32
  }
  func.func @transform_5(%arg0: i32) -> (i32, i32, i32) {
    %c0_i32 = arith.constant 0 : i32
    %c0_i32_0 = arith.constant 0 : i32
    %c0_i32_1 = arith.constant 0 : i32
    return %arg0, %c0_i32, %c0_i32_0 : i32, i32, i32
  }
}

</mosaic_0001>

<llo_original>
// kernel: tpu_custom_call.1
$region0: #{tpu_custom_call.1}
  #allocation0 [shape = 'u32[]', space=smem, size = 0x4, offset = 0x4, fixed_abs, tag = 'smem constant byte address 0x4 - core index']
  #allocation1 [shape = 'u32[144,128]{1,0:T(1,128)}', space=vmem, size = 0x12000, scoped, tag = 'internal scratch']
  %s0 = inlined_call_operand.vmem [shape: f32[2,16,4], index: 0, kind: input, shape index: {}]
  %s1 = inlined_call_operand.vmem [shape: f32[12,8], index: 1, kind: input, shape index: {}]
  %s2 = inlined_call_operand.vmem [shape: f32[1,8], index: 2, kind: input, shape index: {}]
  %s3 = inlined_call_operand.vmem [shape: f32[24,16], index: 3, kind: input, shape index: {}]
  %s4 = inlined_call_operand.vmem [shape: f32[1,16], index: 4, kind: input, shape index: {}]
  %s5 = inlined_call_operand.vmem [shape: f32[2,12,16], index: 5, kind: output, shape index: {}]
  %s6 = sld [smem:[#allocation0]]
  $region30: #{tpu_custom_call.1} parent=0
    _
  %s8 = ssub.s32 1, %s6
  %s9 = scalar_select 0, %s8, %s6
  // Predicated region
  $region2: #{tpu_custom_call.1} parent=0 // pred_check
    _
  $region3: #{tpu_custom_call.1} parent=0 // pred_check_branch
    %11 = sbr.rel (0) target = $region5
  $region4: #{tpu_custom_call.1} parent=0 // pred_region
    _
  $region5: #{tpu_custom_call.1} parent=0 // pred_fallthru
    _
  // Predicated region
  $region6: #{tpu_custom_call.1} parent=0 // pred_check
    _
  $region7: #{tpu_custom_call.1} parent=0 // pred_check_branch
    %13 = sbr.rel (0) target = $region9
  $region8: #{tpu_custom_call.1} parent=0 // pred_region
    _
  $region9: #{tpu_custom_call.1} parent=0 // pred_fallthru
    _
  // Predicated region
  $region10: #{tpu_custom_call.1} parent=0 // pred_check
    _
  $region11: #{tpu_custom_call.1} parent=0 // pred_check_branch
    %15 = sbr.rel (0) target = $region13
  $region12: #{tpu_custom_call.1} parent=0 // pred_region
    _
  $region13: #{tpu_custom_call.1} parent=0 // pred_fallthru
    _
  // Predicated region
  $region14: #{tpu_custom_call.1} parent=0 // pred_check
    _
  $region15: #{tpu_custom_call.1} parent=0 // pred_check_branch
    %17 = sbr.rel (0) target = $region17
  $region16: #{tpu_custom_call.1} parent=0 // pred_region
    _
  $region17: #{tpu_custom_call.1} parent=0 // pred_fallthru
    _
  // Predicated region
  $region18: #{tpu_custom_call.1} parent=0 // pred_check
    _
  $region19: #{tpu_custom_call.1} parent=0 // pred_check_branch
    %19 = sbr.rel (0) target = $region21
  $region20: #{tpu_custom_call.1} parent=0 // pred_region
    _
  $region21: #{tpu_custom_call.1} parent=0 // pred_fallthru
    _
  %v20 = vld [vmem:[%s1] sm:$0xff]
  %v21 = vld [vmem:[%s1 + $0x8] sm:$0xf]
  %v22 = vld [vmem:[%s3] sm:$0xff]
  %v23 = vld [vmem:[%s3 + $0x8] sm:$0xff]
  %v24 = vld [vmem:[%s3 + $0x10] sm:$0xff]
  %v25 = vld [vmem:[%s2] sm:$0x1]
  %v26 = vld [vmem:[%s4] sm:$0x1]
  %v27 = vld [vmem:[%s0] sm:$0xff]
  %v28 = vld [vmem:[%s0 + $0x8] sm:$0x3f]
  %v29 = vld [vmem:[%s0 + $0x1] sm:$0xff]
  %v30 = vld [vmem:[%s0 + $0x9] sm:$0x3f]
  %v31 = vld [vmem:[%s0 + $0x2] sm:$0xff]
  %v32 = vld [vmem:[%s0 + $0xa] sm:$0x3f]
  %35 = vrot.lane.b32.xlu0 %v29, 4
  %v36 = vpop.permute.xlu0 %35
  %37 = vrot.lane.b32.xlu0 %v30, 4
  %v38 = vpop.permute.xlu0 %37
  %43 = vrot.lane.b32.xlu0 %v31, 8
  %v44 = vpop.permute.xlu0 %43
  %45 = vrot.lane.b32.xlu0 %v32, 8
  %v46 = vpop.permute.xlu0 %45
  %vm49 = vcmask 31744
  %v50 = vsel %vm49, %v27, %v36
  %v51 = vsel %vm49, %v28, %v38
  %vm52 = vcmask 64512
  %v53 = vsel %vm52, %v50, %v44
  %v54 = vsel %vm52, %v51, %v46
  %v56 = vlaneseq
  %v57 = vshrl.u32 %v56, 7
  %v58 = vsub.s32 0, %v57
  %v59 = vrot.slane %v25, %v58
  %vm61 = vcmask 97280
  %v63 = vsel %vm61, %v53, 0
  %v66 = vsel %vm61, %v54, 0
  %vm68 = vcmask 1043456
  %v70 = vsel %vm68, %v21, 0
  %72 = vmatprep.subr.mxu0 0.0
  %73 = vmatpush1.msra.mxu0 %v20
  %74 = vmatprep.subr.mxu0 0.0
  %75 = vmatpush1.msra.mxu0 %v70
  %76 = vmatprep.subr.mxu0 0.0
  %77 = vmatpush1.msra.mxu0 0.0
  %78 = vmatprep.subr.mxu0 0.0
  %79 = vmatpush1.msra.mxu0 0.0
  %80 = vmatprep.subr.mxu0 0.0
  %81 = vmatpush1.msra.mxu0 0.0
  %82 = vmatprep.subr.mxu0 0.0
  %83 = vmatpush1.msra.mxu0 0.0
  %84 = vmatprep.subr.mxu0 0.0
  %85 = vmatpush1.msra.mxu0 0.0
  %86 = vmatprep.subr.mxu0 0.0
  %87 = vmatpush1.msra.mxu0 0.0
  %88 = vmatprep.subr.mxu0 0.0
  %89 = vmatpush1.msra.mxu0 0.0
  %90 = vmatprep.subr.mxu0 0.0
  %91 = vmatpush1.msra.mxu0 0.0
  %92 = vmatprep.subr.mxu0 0.0
  %93 = vmatpush1.msra.mxu0 0.0
  %94 = vmatprep.subr.mxu0 0.0
  %95 = vmatpush1.msra.mxu0 0.0
  %96 = vmatprep.subr.mxu0 0.0
  %97 = vmatpush1.msra.mxu0 0.0
  %98 = vmatprep.subr.mxu0 0.0
  %99 = vmatpush1.msra.mxu0 0.0
  %100 = vmatprep.subr.mxu0 0.0
  %101 = vmatpush1.msra.mxu0 0.0
  %102 = vmatprep.subr.mxu0 0.0
  %103 = vmatpush1.msra.mxu0 0.0
  %104 = vmatprep.subr.mxu0 0.0
  %105 = vmatpush1.msra.mxu0 0.0
  %106 = vmatprep.subr.mxu0 0.0
  %107 = vmatpush1.msra.mxu0 0.0
  %108 = vmatprep.subr.mxu0 0.0
  %109 = vmatpush1.msra.mxu0 0.0
  %110 = vmatprep.subr.mxu0 0.0
  %111 = vmatpush1.msra.mxu0 0.0
  %112 = vmatprep.subr.mxu0 0.0
  %113 = vmatpush1.msra.mxu0 0.0
  %114 = vmatprep.subr.mxu0 0.0
  %115 = vmatpush1.msra.mxu0 0.0
  %116 = vmatprep.subr.mxu0 0.0
  %117 = vmatpush1.msra.mxu0 0.0
  %118 = vmatprep.subr.mxu0 0.0
  %119 = vmatpush1.msra.mxu0 0.0
  %120 = vmatprep.subr.mxu0 0.0
  %121 = vmatpush1.msra.mxu0 0.0
  %122 = vmatprep.subr.mxu0 0.0
  %123 = vmatpush1.msra.mxu0 0.0
  %124 = vmatprep.subr.mxu0 0.0
  %125 = vmatpush1.msra.mxu0 0.0
  %126 = vmatprep.subr.mxu0 0.0
  %127 = vmatpush1.msra.mxu0 0.0
  %128 = vmatprep.subr.mxu0 0.0
  %129 = vmatpush1.msra.mxu0 0.0
  %130 = vmatprep.subr.mxu0 0.0
  %131 = vmatpush1.msra.mxu0 0.0
  %132 = vmatprep.subr.mxu0 0.0
  %133 = vmatpush1.msra.mxu0 0.0
  %134 = vmatprep.subr.mxu0 0.0
  %135 = vmatpush1.msra.mxu0 0.0
  %136 = vmatprep.mubr.f32.mxu0 0.0
  %137 = vmatmul.mubr.f32.gmra.mrb[0].mxu0 %v63
  %v138 = vpop.f32.mrb[0].mxu0
  %v139 = vadd.f32 %v59, %v138
  %v140 = vpop.f32.mrb[0].mxu0
  %141 = vmatprep.mubr.f32.mxu0 0.0
  %142 = vmatmul.mubr.f32.gmra.mrb[0].mxu0 %v66
  %v143 = vpop.f32.mrb[0].mxu0
  %v144 = vadd.f32 %v59, %v143
  %v145 = vpop.f32.mrb[0].mxu0
  %146 = vdwg.mxu0
  %v147 = vmax.f32 %v139, 0.0
  %v148 = vmax.f32 %v144, 0.0
  %vm151 = vcmask 1046528
  %v152 = vrot.slane %v147, 1
  %v153 = vrot.slane %v148, 1
  %v154 = vsel %vm151, %v152, %v153
  %155 = vrot.lane.b32.xlu0 %v154, 8
  %v156 = vpop.permute.xlu0 %155
  %157 = vrot.lane.b32.xlu0 %v153, 8
  %v158 = vpop.permute.xlu0 %157
  %vm161 = vcmask 1045504
  %v162 = vrot.slane %v147, 2
  %v163 = vrot.slane %v148, 2
  %v164 = vsel %vm161, %v162, %v163
  %165 = vrot.lane.b32.xlu0 %v164, 16
  %v166 = vpop.permute.xlu0 %165
  %167 = vrot.lane.b32.xlu0 %v163, 16
  %v168 = vpop.permute.xlu0 %167
  %v171 = vsel %vm52, %v147, %v156
  %v172 = vsel %vm52, %v148, %v158
  %vm173 = vcmask 130048
  %v174 = vsel %vm173, %v171, %v166
  %v175 = vsel %vm173, %v172, %v168
  %v177 = vlaneseq
  %v178 = vshrl.u32 %v177, 7
  %v179 = vsub.s32 0, %v178
  %v180 = vrot.slane %v26, %v179
  %vm182 = vcmask 195584
  %v184 = vsel %vm182, %v174, 0
  %v187 = vsel %vm182, %v175, 0
  %189 = vmatprep.subr.mxu0 0.0
  %190 = vmatpush1.msra.mxu0 %v22
  %191 = vmatprep.subr.mxu0 0.0
  %192 = vmatpush1.msra.mxu0 %v23
  %193 = vmatprep.subr.mxu0 0.0
  %194 = vmatpush1.msra.mxu0 %v24
  %195 = vmatprep.subr.mxu0 0.0
  %196 = vmatpush1.msra.mxu0 0.0
  %197 = vmatprep.subr.mxu0 0.0
  %198 = vmatpush1.msra.mxu0 0.0
  %199 = vmatprep.subr.mxu0 0.0
  %200 = vmatpush1.msra.mxu0 0.0
  %201 = vmatprep.subr.mxu0 0.0
  %202 = vmatpush1.msra.mxu0 0.0
  %203 = vmatprep.subr.mxu0 0.0
  %204 = vmatpush1.msra.mxu0 0.0
  %205 = vmatprep.subr.mxu0 0.0
  %206 = vmatpush1.msra.mxu0 0.0
  %207 = vmatprep.subr.mxu0 0.0
  %208 = vmatpush1.msra.mxu0 0.0
  %209 = vmatprep.subr.mxu0 0.0
  %210 = vmatpush1.msra.mxu0 0.0
  %211 = vmatprep.subr.mxu0 0.0
  %212 = vmatpush1.msra.mxu0 0.0
  %213 = vmatprep.subr.mxu0 0.0
  %214 = vmatpush1.msra.mxu0 0.0
  %215 = vmatprep.subr.mxu0 0.0
  %216 = vmatpush1.msra.mxu0 0.0
  %217 = vmatprep.subr.mxu0 0.0
  %218 = vmatpush1.msra.mxu0 0.0
  %219 = vmatprep.subr.mxu0 0.0
  %220 = vmatpush1.msra.mxu0 0.0
  %221 = vmatprep.subr.mxu0 0.0
  %222 = vmatpush1.msra.mxu0 0.0
  %223 = vmatprep.subr.mxu0 0.0
  %224 = vmatpush1.msra.mxu0 0.0
  %225 = vmatprep.subr.mxu0 0.0
  %226 = vmatpush1.msra.mxu0 0.0
  %227 = vmatprep.subr.mxu0 0.0
  %228 = vmatpush1.msra.mxu0 0.0
  %229 = vmatprep.subr.mxu0 0.0
  %230 = vmatpush1.msra.mxu0 0.0
  %231 = vmatprep.subr.mxu0 0.0
  %232 = vmatpush1.msra.mxu0 0.0
  %233 = vmatprep.subr.mxu0 0.0
  %234 = vmatpush1.msra.mxu0 0.0
  %235 = vmatprep.subr.mxu0 0.0
  %236 = vmatpush1.msra.mxu0 0.0
  %237 = vmatprep.subr.mxu0 0.0
  %238 = vmatpush1.msra.mxu0 0.0
  %239 = vmatprep.subr.mxu0 0.0
  %240 = vmatpush1.msra.mxu0 0.0
  %241 = vmatprep.subr.mxu0 0.0
  %242 = vmatpush1.msra.mxu0 0.0
  %243 = vmatprep.subr.mxu0 0.0
  %244 = vmatpush1.msra.mxu0 0.0
  %245 = vmatprep.subr.mxu0 0.0
  %246 = vmatpush1.msra.mxu0 0.0
  %247 = vmatprep.subr.mxu0 0.0
  %248 = vmatpush1.msra.mxu0 0.0
  %249 = vmatprep.subr.mxu0 0.0
  %250 = vmatpush1.msra.mxu0 0.0
  %251 = vmatprep.subr.mxu0 0.0
  %252 = vmatpush1.msra.mxu0 0.0
  %253 = vmatprep.mubr.f32.mxu0 0.0
  %254 = vmatmul.mubr.f32.gmra.mrb[0].mxu0 %v184
  %v255 = vpop.f32.mrb[0].mxu0
  %v256 = vadd.f32 %v180, %v255
  %v257 = vpop.f32.mrb[0].mxu0
  %258 = vmatprep.mubr.f32.mxu0 0.0
  %259 = vmatmul.mubr.f32.gmra.mrb[0].mxu0 %v187
  %v260 = vpop.f32.mrb[0].mxu0
  %v261 = vadd.f32 %v180, %v260
  %v262 = vpop.f32.mrb[0].mxu0
  %263 = vdwg.mxu0
  %264 = vst.msk [vmem:[%s5] sm:$0xff] %vm173, %v256
  %vm265 = vcmask 125952
  %266 = vst.msk [vmem:[%s5 + $0x8] sm:$0xf] %vm265, %v261
  %s267 = scalar_lea.vmem %s0, 16
  %v268 = vld [vmem:[%s267] sm:$0xff]
  %v269 = vld [vmem:[%s267 + $0x8] sm:$0x3f]
  %v270 = vld [vmem:[%s267 + $0x1] sm:$0xff]
  %v271 = vld [vmem:[%s267 + $0x9] sm:$0x3f]
  %v272 = vld [vmem:[%s267 + $0x2] sm:$0xff]
  %v273 = vld [vmem:[%s267 + $0xa] sm:$0x3f]
  %276 = vrot.lane.b32.xlu0 %v270, 4
  %v277 = vpop.permute.xlu0 %276
  %278 = vrot.lane.b32.xlu0 %v271, 4
  %v279 = vpop.permute.xlu0 %278
  %284 = vrot.lane.b32.xlu0 %v272, 8
  %v285 = vpop.permute.xlu0 %284
  %286 = vrot.lane.b32.xlu0 %v273, 8
  %v287 = vpop.permute.xlu0 %286
  %v290 = vsel %vm49, %v268, %v277
  %v291 = vsel %vm49, %v269, %v279
  %v292 = vsel %vm52, %v290, %v285
  %v293 = vsel %vm52, %v291, %v287
  %v295 = vsel %vm61, %v292, 0
  %v298 = vsel %vm61, %v293, 0
  %300 = vmatprep.subr.mxu0 0.0
  %301 = vmatpush1.msra.mxu0 %v20
  %302 = vmatprep.subr.mxu0 0.0
  %303 = vmatpush1.msra.mxu0 %v70
  %304 = vmatprep.subr.mxu0 0.0
  %305 = vmatpush1.msra.mxu0 0.0
  %306 = vmatprep.subr.mxu0 0.0
  %307 = vmatpush1.msra.mxu0 0.0
  %308 = vmatprep.subr.mxu0 0.0
  %309 = vmatpush1.msra.mxu0 0.0
  %310 = vmatprep.subr.mxu0 0.0
  %311 = vmatpush1.msra.mxu0 0.0
  %312 = vmatprep.subr.mxu0 0.0
  %313 = vmatpush1.msra.mxu0 0.0
  %314 = vmatprep.subr.mxu0 0.0
  %315 = vmatpush1.msra.mxu0 0.0
  %316 = vmatprep.subr.mxu0 0.0
  %317 = vmatpush1.msra.mxu0 0.0
  %318 = vmatprep.subr.mxu0 0.0
  %319 = vmatpush1.msra.mxu0 0.0
  %320 = vmatprep.subr.mxu0 0.0
  %321 = vmatpush1.msra.mxu0 0.0
  %322 = vmatprep.subr.mxu0 0.0
  %323 = vmatpush1.msra.mxu0 0.0
  %324 = vmatprep.subr.mxu0 0.0
  %325 = vmatpush1.msra.mxu0 0.0
  %326 = vmatprep.subr.mxu0 0.0
  %327 = vmatpush1.msra.mxu0 0.0
  %328 = vmatprep.subr.mxu0 0.0
  %329 = vmatpush1.msra.mxu0 0.0
  %330 = vmatprep.subr.mxu0 0.0
  %331 = vmatpush1.msra.mxu0 0.0
  %332 = vmatprep.subr.mxu0 0.0
  %333 = vmatpush1.msra.mxu0 0.0
  %334 = vmatprep.subr.mxu0 0.0
  %335 = vmatpush1.msra.mxu0 0.0
  %336 = vmatprep.subr.mxu0 0.0
  %337 = vmatpush1.msra.mxu0 0.0
  %338 = vmatprep.subr.mxu0 0.0
  %339 = vmatpush1.msra.mxu0 0.0
  %340 = vmatprep.subr.mxu0 0.0
  %341 = vmatpush1.msra.mxu0 0.0
  %342 = vmatprep.subr.mxu0 0.0
  %343 = vmatpush1.msra.mxu0 0.0
  %344 = vmatprep.subr.mxu0 0.0
  %345 = vmatpush1.msra.mxu0 0.0
  %346 = vmatprep.subr.mxu0 0.0
  %347 = vmatpush1.msra.mxu0 0.0
  %348 = vmatprep.subr.mxu0 0.0
  %349 = vmatpush1.msra.mxu0 0.0
  %350 = vmatprep.subr.mxu0 0.0
  %351 = vmatpush1.msra.mxu0 0.0
  %352 = vmatprep.subr.mxu0 0.0
  %353 = vmatpush1.msra.mxu0 0.0
  %354 = vmatprep.subr.mxu0 0.0
  %355 = vmatpush1.msra.mxu0 0.0
  %356 = vmatprep.subr.mxu0 0.0
  %357 = vmatpush1.msra.mxu0 0.0
  %358 = vmatprep.subr.mxu0 0.0
  %359 = vmatpush1.msra.mxu0 0.0
  %360 = vmatprep.subr.mxu0 0.0
  %361 = vmatpush1.msra.mxu0 0.0
  %362 = vmatprep.subr.mxu0 0.0
  %363 = vmatpush1.msra.mxu0 0.0
  %364 = vmatprep.mubr.f32.mxu0 0.0
  %365 = vmatmul.mubr.f32.gmra.mrb[0].mxu0 %v295
  %v366 = vpop.f32.mrb[0].mxu0
  %v367 = vadd.f32 %v59, %v366
  %v368 = vpop.f32.mrb[0].mxu0
  %369 = vmatprep.mubr.f32.mxu0 0.0
  %370 = vmatmul.mubr.f32.gmra.mrb[0].mxu0 %v298
  %v371 = vpop.f32.mrb[0].mxu0
  %v372 = vadd.f32 %v59, %v371
  %v373 = vpop.f32.mrb[0].mxu0
  %374 = vdwg.mxu0
  %v375 = vmax.f32 %v367, 0.0
  %v376 = vmax.f32 %v372, 0.0
  %v379 = vrot.slane %v375, 1
  %v380 = vrot.slane %v376, 1
  %v381 = vsel %vm151, %v379, %v380
  %382 = vrot.lane.b32.xlu0 %v381, 8
  %v383 = vpop.permute.xlu0 %382
  %384 = vrot.lane.b32.xlu0 %v380, 8
  %v385 = vpop.permute.xlu0 %384
  %v388 = vrot.slane %v375, 2
  %v389 = vrot.slane %v376, 2
  %v390 = vsel %vm161, %v388, %v389
  %391 = vrot.lane.b32.xlu0 %v390, 16
  %v392 = vpop.permute.xlu0 %391
  %393 = vrot.lane.b32.xlu0 %v389, 16
  %v394 = vpop.permute.xlu0 %393
  %v397 = vsel %vm52, %v375, %v383
  %v398 = vsel %vm52, %v376, %v385
  %v399 = vsel %vm173, %v397, %v392
  %v400 = vsel %vm173, %v398, %v394
  %v402 = vsel %vm182, %v399, 0
  %v405 = vsel %vm182, %v400, 0
  %407 = vmatprep.subr.mxu0 0.0
  %408 = vmatpush1.msra.mxu0 %v22
  %409 = vmatprep.subr.mxu0 0.0
  %410 = vmatpush1.msra.mxu0 %v23
  %411 = vmatprep.subr.mxu0 0.0
  %412 = vmatpush1.msra.mxu0 %v24
  %413 = vmatprep.subr.mxu0 0.0
  %414 = vmatpush1.msra.mxu0 0.0
  %415 = vmatprep.subr.mxu0 0.0
  %416 = vmatpush1.msra.mxu0 0.0
  %417 = vmatprep.subr.mxu0 0.0
  %418 = vmatpush1.msra.mxu0 0.0
  %419 = vmatprep.subr.mxu0 0.0
  %420 = vmatpush1.msra.mxu0 0.0
  %421 = vmatprep.subr.mxu0 0.0
  %422 = vmatpush1.msra.mxu0 0.0
  %423 = vmatprep.subr.mxu0 0.0
  %424 = vmatpush1.msra.mxu0 0.0
  %425 = vmatprep.subr.mxu0 0.0
  %426 = vmatpush1.msra.mxu0 0.0
  %427 = vmatprep.subr.mxu0 0.0
  %428 = vmatpush1.msra.mxu0 0.0
  %429 = vmatprep.subr.mxu0 0.0
  %430 = vmatpush1.msra.mxu0 0.0
  %431 = vmatprep.subr.mxu0 0.0
  %432 = vmatpush1.msra.mxu0 0.0
  %433 = vmatprep.subr.mxu0 0.0
  %434 = vmatpush1.msra.mxu0 0.0
  %435 = vmatprep.subr.mxu0 0.0
  %436 = vmatpush1.msra.mxu0 0.0
  %437 = vmatprep.subr.mxu0 0.0
  %438 = vmatpush1.msra.mxu0 0.0
  %439 = vmatprep.subr.mxu0 0.0
  %440 = vmatpush1.msra.mxu0 0.0
  %441 = vmatprep.subr.mxu0 0.0
  %442 = vmatpush1.msra.mxu0 0.0
  %443 = vmatprep.subr.mxu0 0.0
  %444 = vmatpush1.msra.mxu0 0.0
  %445 = vmatprep.subr.mxu0 0.0
  %446 = vmatpush1.msra.mxu0 0.0
  %447 = vmatprep.subr.mxu0 0.0
  %448 = vmatpush1.msra.mxu0 0.0
  %449 = vmatprep.subr.mxu0 0.0
  %450 = vmatpush1.msra.mxu0 0.0
  %451 = vmatprep.subr.mxu0 0.0
  %452 = vmatpush1.msra.mxu0 0.0
  %453 = vmatprep.subr.mxu0 0.0
  %454 = vmatpush1.msra.mxu0 0.0
  %455 = vmatprep.subr.mxu0 0.0
  %456 = vmatpush1.msra.mxu0 0.0
  %457 = vmatprep.subr.mxu0 0.0
  %458 = vmatpush1.msra.mxu0 0.0
  %459 = vmatprep.subr.mxu0 0.0
  %460 = vmatpush1.msra.mxu0 0.0
  %461 = vmatprep.subr.mxu0 0.0
  %462 = vmatpush1.msra.mxu0 0.0
  %463 = vmatprep.subr.mxu0 0.0
  %464 = vmatpush1.msra.mxu0 0.0
  %465 = vmatprep.subr.mxu0 0.0
  %466 = vmatpush1.msra.mxu0 0.0
  %467 = vmatprep.subr.mxu0 0.0
  %468 = vmatpush1.msra.mxu0 0.0
  %469 = vmatprep.subr.mxu0 0.0
  %470 = vmatpush1.msra.mxu0 0.0
  %471 = vmatprep.mubr.f32.mxu0 0.0
  %472 = vmatmul.mubr.f32.gmra.mrb[0].mxu0 %v402
  %v473 = vpop.f32.mrb[0].mxu0
  %v474 = vadd.f32 %v180, %v473
  %v475 = vpop.f32.mrb[0].mxu0
  %476 = vmatprep.mubr.f32.mxu0 0.0
  %477 = vmatmul.mubr.f32.gmra.mrb[0].mxu0 %v405
  %v478 = vpop.f32.mrb[0].mxu0
  %v479 = vadd.f32 %v180, %v478
  %v480 = vpop.f32.mrb[0].mxu0
  %481 = vdwg.mxu0
  %s482 = scalar_lea.vmem %s5, 16
  %483 = vst.msk [vmem:[%s482] sm:$0xff] %vm173, %v474
  %484 = vst.msk [vmem:[%s482 + $0x8] sm:$0xf] %vm265, %v479
  // Predicated region
  $region22: #{tpu_custom_call.1} parent=0 // pred_check
    _
  $region23: #{tpu_custom_call.1} parent=0 // pred_check_branch
    %486 = sbr.rel (0) target = $region25
  $region24: #{tpu_custom_call.1} parent=0 // pred_region
    _
  $region25: #{tpu_custom_call.1} parent=0 // pred_fallthru
    _
  // Predicated region
  $region26: #{tpu_custom_call.1} parent=0 // pred_check
    _
  $region27: #{tpu_custom_call.1} parent=0 // pred_check_branch
    %488 = sbr.rel (0) target = $region29
  $region28: #{tpu_custom_call.1} parent=0 // pred_region
    _
  $region29: #{tpu_custom_call.1} parent=0 // pred_fallthru
    _

</llo_original>
